<compile_context>
chip_gen: v7x
topology: tpu7x:2x2x1
jax: 0.10.0
libtpu: 0.0.40
codegen_flags: <defaults>
</compile_context>

<pallas_src>
import jax
import jax.numpy as jnp
from jax.experimental import pallas as pl
from jax.experimental.pallas import tpu as pltpu

# ---- config consistent with the module's forward ----
IM_SIZE = (16, 16)
IN_CHANNELS = 4
HIDDEN_DIMS = [32, 32]
NUM_CLASSES = 10
BATCH = 2

INPUT_DIM = IM_SIZE[0] * IM_SIZE[1] * IN_CHANNELS          # 1024
LAYER_DIMS = [INPUT_DIM] + HIDDEN_DIMS + [NUM_CLASSES]     # [1024, 32, 32, 10]
NUM_LAYERS = len(LAYER_DIMS) - 1                           # 3 Linear layers
OUT_PAD = 128            # lane-dense padded logits width (real logits in [:, :NUM_CLASSES])
BATCH_TILE = 256         # batch tile used only on the large-batch grid path


def mlp_kernel(x_ref, *refs):
    """x_ref: (tb, INPUT_DIM) f32; refs = (w0, b0, w1, b1, ..., out_ref).

    Weights are bf16; every dot is bf16 x bf16 -> f32 accumulation (single MXU
    pass on all generations). Biases are f32, added post-accumulation.
    """
    out_ref = refs[-1]
    param_refs = refs[:-1]
    h = x_ref[...].astype(jnp.bfloat16)                     # explicit bf16 operand
    for i in range(NUM_LAYERS):
        w = param_refs[2 * i][...]                          # (d_in, d_out) bf16
        b = param_refs[2 * i + 1][...]                      # (1, d_out) f32
        acc = jnp.dot(h, w, preferred_element_type=jnp.float32) + b
        if i < NUM_LAYERS - 1:                              # ReLU on hidden layers only
            h = jnp.maximum(acc, 0.0).astype(jnp.bfloat16)  # bf16 operand for next pass
        else:
            h = acc
    out_ref[...] = h.astype(out_ref.dtype)                  # single unmasked lane-dense store


def init_params(key):
    """PyTorch-Linear-like init; weights stored bf16 as (in, out), biases f32 (1, out)."""
    params = []
    keys = jax.random.split(key, 2 * NUM_LAYERS)
    for i in range(NUM_LAYERS):
        d_in, d_out = LAYER_DIMS[i], LAYER_DIMS[i + 1]
        bound = 1.0 / jnp.sqrt(float(d_in))
        w = jax.random.uniform(keys[2 * i], (d_in, d_out), jnp.float32,
                               minval=-bound, maxval=bound).astype(jnp.bfloat16)
        b = jax.random.uniform(keys[2 * i + 1], (1, d_out), jnp.float32,
                               minval=-bound, maxval=bound)
        params += [w, b]
    return params


def _pad_last_layer(params):
    """Pad final Linear to OUT_PAD output features (zeros) for a lane-dense store."""
    padded = list(params)
    w_last, b_last = padded[-2], padded[-1]
    pad = OUT_PAD - w_last.shape[1]
    padded[-2] = jnp.pad(w_last, ((0, 0), (0, pad)))
    padded[-1] = jnp.pad(b_last, ((0, 0), (0, pad)))
    return padded


def mlp_forward_pallas(x_bchw, params):
    B = x_bchw.shape[0]
    x_flat = x_bchw.reshape(B, -1).astype(jnp.float32)      # == torch flatten(start_dim=1)
    padded = _pad_last_layer(params)
    n_in = 1 + len(padded)

    if B <= BATCH_TILE:
        # Small batch: one gridless invocation, everything whole-array in VMEM.
        out = pl.pallas_call(
            mlp_kernel,
            out_shape=jax.ShapeDtypeStruct((B, OUT_PAD), jnp.float32),
            in_specs=[pl.BlockSpec(memory_space=pltpu.MemorySpace.VMEM)] * n_in,
            out_specs=pl.BlockSpec(memory_space=pltpu.MemorySpace.VMEM),
        )(x_flat, *padded)
    else:
        # Large batch: shard rows across a parallel grid (engages both v7x TCs).
        assert B % BATCH_TILE == 0, "pad batch to a multiple of BATCH_TILE"
        param_specs = []
        for i in range(NUM_LAYERS):
            d_in, d_out = padded[2 * i].shape
            param_specs.append(pl.BlockSpec((d_in, d_out), lambda g: (0, 0)))
            param_specs.append(pl.BlockSpec((1, padded[2 * i + 1].shape[1]),
                                            lambda g: (0, 0)))
        out = pl.pallas_call(
            mlp_kernel,
            out_shape=jax.ShapeDtypeStruct((B, OUT_PAD), jnp.float32),
            grid=(B // BATCH_TILE,),
            in_specs=[pl.BlockSpec((BATCH_TILE, INPUT_DIM), lambda g: (g, 0))]
                     + param_specs,
            out_specs=pl.BlockSpec((BATCH_TILE, OUT_PAD), lambda g: (g, 0)),
            compiler_params=pltpu.CompilerParams(dimension_semantics=("parallel",)),
        )(x_flat, *padded)

    return out[:, :NUM_CLASSES]


def mlp_forward_ref(x_bchw, params):
    """Pure-JAX reference with identical math (same bf16-stored weights)."""
    h = x_bchw.reshape(x_bchw.shape[0], -1).astype(jnp.bfloat16)
    for i in range(NUM_LAYERS):
        w, b = params[2 * i], params[2 * i + 1]
        h = jnp.dot(h, w, preferred_element_type=jnp.float32) + b
        if i < NUM_LAYERS - 1:
            h = jnp.maximum(h, 0.0).astype(jnp.bfloat16)
    return h


if __name__ == "__main__":
    key = jax.random.PRNGKey(0)
    kp, kx = jax.random.split(key)
    params = init_params(kp)
    x = jax.random.normal(kx, (BATCH, IN_CHANNELS, *IM_SIZE), jnp.float32)

    out = jax.block_until_ready(mlp_forward_pallas(x, params))
    ref = jax.block_until_ready(mlp_forward_ref(x, params))

    assert out.shape == (BATCH, NUM_CLASSES), out.shape
    assert bool(jnp.all(jnp.isfinite(out)))
    # bf16 operands on both sides; tolerance covers accumulation-order differences.
    assert bool(jnp.allclose(out, ref, atol=5e-2, rtol=5e-2)), (out, ref)
    print("KERNEL_OK")
</pallas_src>

<mosaic_0001>
module attributes {stable_mosaic.version = 11 : i64} {
  func.func @mlp_kernel(%arg0: memref<2x1024xf32, #tpu.memory_space<vmem>>, %arg1: memref<1024x32xbf16, #tpu.memory_space<vmem>>, %arg2: memref<1x32xf32, #tpu.memory_space<vmem>>, %arg3: memref<32x32xbf16, #tpu.memory_space<vmem>>, %arg4: memref<1x32xf32, #tpu.memory_space<vmem>>, %arg5: memref<32x128xbf16, #tpu.memory_space<vmem>>, %arg6: memref<1x128xf32, #tpu.memory_space<vmem>>, %arg7: memref<2x128xf32, #tpu.memory_space<vmem>>) attributes {dimension_semantics = [], scalar_prefetch = 0 : i64, scratch_operands = 0 : i64, tpu.core_type = #tpu.core_type<tc>} {
    %c0 = arith.constant 0 : index
    %c0_0 = arith.constant 0 : index
    %0 = vector.load %arg0[%c0, %c0_0] : memref<2x1024xf32, #tpu.memory_space<vmem>>, vector<2x1024xf32>
    %1 = arith.truncf %0 : vector<2x1024xf32> to vector<2x1024xbf16>
    %c0_1 = arith.constant 0 : index
    %c0_2 = arith.constant 0 : index
    %2 = vector.load %arg1[%c0_1, %c0_2] : memref<1024x32xbf16, #tpu.memory_space<vmem>>, vector<1024x32xbf16>
    %c0_3 = arith.constant 0 : index
    %c0_4 = arith.constant 0 : index
    %3 = vector.load %arg2[%c0_3, %c0_4] : memref<1x32xf32, #tpu.memory_space<vmem>>, vector<1x32xf32>
    %cst = arith.constant dense<0.000000e+00> : vector<2x32xf32>
    %4 = tpu.matmul %1, %2, %cst {dimension_numbers = #tpu.dot_dimension_numbers<[1], [0], [0], [1], [0, 0, 1, 1], [], []>} : vector<2x1024xbf16>, vector<1024x32xbf16>, vector<2x32xf32> -> vector<2x32xf32>
    %5 = vector.broadcast %3 : vector<1x32xf32> to vector<2x32xf32>
    %6 = arith.addf %4, %5 : vector<2x32xf32>
    %cst_5 = arith.constant 0.000000e+00 : f32
    %7 = vector.broadcast %cst_5 : f32 to vector<2x32xf32>
    %8 = arith.maximumf %6, %7 : vector<2x32xf32>
    %9 = arith.truncf %8 : vector<2x32xf32> to vector<2x32xbf16>
    %c0_6 = arith.constant 0 : index
    %c0_7 = arith.constant 0 : index
    %10 = vector.load %arg3[%c0_6, %c0_7] : memref<32x32xbf16, #tpu.memory_space<vmem>>, vector<32x32xbf16>
    %c0_8 = arith.constant 0 : index
    %c0_9 = arith.constant 0 : index
    %11 = vector.load %arg4[%c0_8, %c0_9] : memref<1x32xf32, #tpu.memory_space<vmem>>, vector<1x32xf32>
    %cst_10 = arith.constant dense<0.000000e+00> : vector<2x32xf32>
    %12 = tpu.matmul %9, %10, %cst_10 {dimension_numbers = #tpu.dot_dimension_numbers<[1], [0], [0], [1], [0, 0, 1, 1], [], []>} : vector<2x32xbf16>, vector<32x32xbf16>, vector<2x32xf32> -> vector<2x32xf32>
    %13 = vector.broadcast %11 : vector<1x32xf32> to vector<2x32xf32>
    %14 = arith.addf %12, %13 : vector<2x32xf32>
    %cst_11 = arith.constant 0.000000e+00 : f32
    %15 = vector.broadcast %cst_11 : f32 to vector<2x32xf32>
    %16 = arith.maximumf %14, %15 : vector<2x32xf32>
    %17 = arith.truncf %16 : vector<2x32xf32> to vector<2x32xbf16>
    %c0_12 = arith.constant 0 : index
    %c0_13 = arith.constant 0 : index
    %18 = vector.load %arg5[%c0_12, %c0_13] : memref<32x128xbf16, #tpu.memory_space<vmem>>, vector<32x128xbf16>
    %c0_14 = arith.constant 0 : index
    %c0_15 = arith.constant 0 : index
    %19 = vector.load %arg6[%c0_14, %c0_15] : memref<1x128xf32, #tpu.memory_space<vmem>>, vector<1x128xf32>
    %cst_16 = arith.constant dense<0.000000e+00> : vector<2x128xf32>
    %20 = tpu.matmul %17, %18, %cst_16 {dimension_numbers = #tpu.dot_dimension_numbers<[1], [0], [0], [1], [0, 0, 1, 1], [], []>} : vector<2x32xbf16>, vector<32x128xbf16>, vector<2x128xf32> -> vector<2x128xf32>
    %21 = vector.broadcast %19 : vector<1x128xf32> to vector<2x128xf32>
    %22 = arith.addf %20, %21 : vector<2x128xf32>
    %c0_17 = arith.constant 0 : index
    %c0_18 = arith.constant 0 : index
    %23 = vector.load %arg7[%c0_17, %c0_18] : memref<2x128xf32, #tpu.memory_space<vmem>>, vector<2x128xf32>
    tpu.vector_store %arg7[%c0_17, %c0_18], %22 {strides = array<i32>} : memref<2x128xf32, #tpu.memory_space<vmem>>, vector<2x128xf32>,
    return
  }
}

</mosaic_0001>

<llo_original>
// kernel: tpu_custom_call.1
$region0: #{tpu_custom_call.1}
  #allocation0 [shape = 'u32[]', space=smem, size = 0x4, offset = 0x4, fixed_abs, tag = 'smem constant byte address 0x4 - core index']
  #allocation1 [shape = 'u32[144,128]{1,0:T(1,128)}', space=vmem, size = 0x12000, scoped, tag = 'internal scratch']
  %s0 = inlined_call_operand.vmem [shape: f32[2,1024], index: 0, kind: input, shape index: {}]
  %s1 = inlined_call_operand.vmem [shape: bf16[1024,32], index: 1, kind: input, shape index: {}]
  %s2 = inlined_call_operand.vmem [shape: f32[1,32], index: 2, kind: input, shape index: {}]
  %s3 = inlined_call_operand.vmem [shape: bf16[32,32], index: 3, kind: input, shape index: {}]
  %s4 = inlined_call_operand.vmem [shape: f32[1,32], index: 4, kind: input, shape index: {}]
  %s5 = inlined_call_operand.vmem [shape: bf16[32,128], index: 5, kind: input, shape index: {}]
  %s6 = inlined_call_operand.vmem [shape: f32[1,128], index: 6, kind: input, shape index: {}]
  %s7 = inlined_call_operand.hbm [shape: f32[2,128], index: 7, kind: output, shape index: {}]
  %s8 = sld [smem:[#allocation0]]
  $region38: #{tpu_custom_call.1} parent=0
    _
  %s10 = ssub.s32 1, %s8
  %s11 = scalar_select 0, %s10, %s8
  $region1: #{tpu_custom_call.1} parent=0
    #allocation2 [shape = 'u8[1024]{0}', space=vmem, size = 0x400, scoped, tag = 'output window, operand 0, single buffered']
    #allocation3 [shape = 's32[1]{0}', space=sflag, size = 0x4, scoped, tag = 'scoped memory for tpu_custom_call.1']
    %12 = vsyncpa [#allocation3], 0
    // Predicated region
    $region2: #{tpu_custom_call.1} parent=1 // pred_check
      _
    $region3: #{tpu_custom_call.1} parent=1 // pred_check_branch
      %14 = sbr.rel (0) target = $region5
    $region4: #{tpu_custom_call.1} parent=1 // pred_region
      _
    $region5: #{tpu_custom_call.1} parent=1 // pred_fallthru
      _
    // Predicated region
    $region6: #{tpu_custom_call.1} parent=1 // pred_check
      _
    $region7: #{tpu_custom_call.1} parent=1 // pred_check_branch
      %16 = sbr.rel (0) target = $region9
    $region8: #{tpu_custom_call.1} parent=1 // pred_region
      _
    $region9: #{tpu_custom_call.1} parent=1 // pred_fallthru
      _
    // Predicated region
    $region10: #{tpu_custom_call.1} parent=1 // pred_check
      _
    $region11: #{tpu_custom_call.1} parent=1 // pred_check_branch
      %18 = sbr.rel (0) target = $region13
    $region12: #{tpu_custom_call.1} parent=1 // pred_region
      _
    $region13: #{tpu_custom_call.1} parent=1 // pred_fallthru
      _
    // Predicated region
    $region14: #{tpu_custom_call.1} parent=1 // pred_check
      _
    $region15: #{tpu_custom_call.1} parent=1 // pred_check_branch
      %20 = sbr.rel (0) target = $region17
    $region16: #{tpu_custom_call.1} parent=1 // pred_region
      _
    $region17: #{tpu_custom_call.1} parent=1 // pred_fallthru
      _
    // Predicated region
    $region18: #{tpu_custom_call.1} parent=1 // pred_check
      _
    $region19: #{tpu_custom_call.1} parent=1 // pred_check_branch
      %22 = sbr.rel (0) target = $region21
    $region20: #{tpu_custom_call.1} parent=1 // pred_region
      _
    $region21: #{tpu_custom_call.1} parent=1 // pred_fallthru
      _
    // Predicated region
    $region22: #{tpu_custom_call.1} parent=1 // pred_check
      _
    $region23: #{tpu_custom_call.1} parent=1 // pred_check_branch
      %24 = sbr.rel (0) target = $region25
    $region24: #{tpu_custom_call.1} parent=1 // pred_region
      _
    $region25: #{tpu_custom_call.1} parent=1 // pred_fallthru
      _
    // Predicated region
    $region26: #{tpu_custom_call.1} parent=1 // pred_check
      _
    $region27: #{tpu_custom_call.1} parent=1 // pred_check_branch
      %26 = sbr.rel (0) target = $region29
    $region28: #{tpu_custom_call.1} parent=1 // pred_region
      _
    $region29: #{tpu_custom_call.1} parent=1 // pred_fallthru
      _
    %v28 = vld [vmem:[%s0] sm:$0xff]
    %v29 = vld [vmem:[%s0 + $0x8] sm:$0xff]
    %v32 = vcombine.high %v28, %v28
    %v34 = vunpack.c.l.s4 1983009808
    %v35 = vunpack.c.0.s8 %v34
    %v36 = vlaneseq
    %v37 = vshrl.u32 %v36, 7
    %v38 = vsub.s32 %v35, %v37
    %v39 = vrot.slane %v28, %v38
    %v41 = vunpack.c.l.s4 1983009808
    %v42 = vunpack.c.0.s8 %v41
    %v43 = vlaneseq
    %v44 = vshrl.u32 %v43, 7
    %v45 = vsub.s32 %v42, %v44
    %v46 = vrot.slane %v32, %v45
    %v47 = vcombine.high %v39, %v39
    %v48 = vcombine.high %v46, %v46
    %v49 = vcombine.high %v29, %v29
    %v51 = vunpack.c.l.s4 1983009808
    %v52 = vunpack.c.0.s8 %v51
    %v53 = vlaneseq
    %v54 = vshrl.u32 %v53, 7
    %v55 = vsub.s32 %v52, %v54
    %v56 = vrot.slane %v29, %v55
    %v58 = vunpack.c.l.s4 1983009808
    %v59 = vunpack.c.0.s8 %v58
    %v60 = vlaneseq
    %v61 = vshrl.u32 %v60, 7
    %v62 = vsub.s32 %v59, %v61
    %v63 = vrot.slane %v49, %v62
    %v64 = vcombine.high %v56, %v56
    %v65 = vcombine.high %v63, %v63
    %v74 = vpack.c.bf16 %v39, %v39
    %v75 = vpack.c.bf16 %v47, %v47
    %v76 = vpack.c.bf16 %v46, %v46
    %v77 = vpack.c.bf16 %v48, %v48
    %v78 = vpack.c.bf16 %v56, %v56
    %v79 = vpack.c.bf16 %v64, %v64
    %v80 = vpack.c.bf16 %v63, %v63
    %v81 = vpack.c.bf16 %v65, %v65
    %v82 = vld [vmem:[%s1] sm:$0xf]
    %v83 = vld [vmem:[%s1 + $0x4] sm:$0xf]
    %v84 = vld [vmem:[%s1 + $0x8] sm:$0xf]
    %v85 = vld [vmem:[%s1 + $0xc] sm:$0xf]
    %v86 = vld [vmem:[%s1 + $0x10] sm:$0xf]
    %v87 = vld [vmem:[%s1 + $0x14] sm:$0xf]
    %v88 = vld [vmem:[%s1 + $0x18] sm:$0xf]
    %v89 = vld [vmem:[%s1 + $0x1c] sm:$0xf]
    %v90 = vld [vmem:[%s1 + $0x20] sm:$0xf]
    %v91 = vld [vmem:[%s1 + $0x24] sm:$0xf]
    %v92 = vld [vmem:[%s1 + $0x28] sm:$0xf]
    %v93 = vld [vmem:[%s1 + $0x2c] sm:$0xf]
    %v94 = vld [vmem:[%s1 + $0x30] sm:$0xf]
    %v95 = vld [vmem:[%s1 + $0x34] sm:$0xf]
    %v96 = vld [vmem:[%s1 + $0x38] sm:$0xf]
    %v97 = vld [vmem:[%s1 + $0x3c] sm:$0xf]
    %v98 = vld [vmem:[%s1 + $0x40] sm:$0xf]
    %v99 = vld [vmem:[%s1 + $0x44] sm:$0xf]
    %v100 = vld [vmem:[%s1 + $0x48] sm:$0xf]
    %v101 = vld [vmem:[%s1 + $0x4c] sm:$0xf]
    %v102 = vld [vmem:[%s1 + $0x50] sm:$0xf]
    %v103 = vld [vmem:[%s1 + $0x54] sm:$0xf]
    %v104 = vld [vmem:[%s1 + $0x58] sm:$0xf]
    %v105 = vld [vmem:[%s1 + $0x5c] sm:$0xf]
    %v106 = vld [vmem:[%s1 + $0x60] sm:$0xf]
    %v107 = vld [vmem:[%s1 + $0x64] sm:$0xf]
    %v108 = vld [vmem:[%s1 + $0x68] sm:$0xf]
    %v109 = vld [vmem:[%s1 + $0x6c] sm:$0xf]
    %v110 = vld [vmem:[%s1 + $0x70] sm:$0xf]
    %v111 = vld [vmem:[%s1 + $0x74] sm:$0xf]
    %v112 = vld [vmem:[%s1 + $0x78] sm:$0xf]
    %v113 = vld [vmem:[%s1 + $0x7c] sm:$0xf]
    %v114 = vld [vmem:[%s1 + $0x80] sm:$0xf]
    %v115 = vld [vmem:[%s1 + $0x84] sm:$0xf]
    %v116 = vld [vmem:[%s1 + $0x88] sm:$0xf]
    %v117 = vld [vmem:[%s1 + $0x8c] sm:$0xf]
    %v118 = vld [vmem:[%s1 + $0x90] sm:$0xf]
    %v119 = vld [vmem:[%s1 + $0x94] sm:$0xf]
    %v120 = vld [vmem:[%s1 + $0x98] sm:$0xf]
    %v121 = vld [vmem:[%s1 + $0x9c] sm:$0xf]
    %v122 = vld [vmem:[%s1 + $0xa0] sm:$0xf]
    %v123 = vld [vmem:[%s1 + $0xa4] sm:$0xf]
    %v124 = vld [vmem:[%s1 + $0xa8] sm:$0xf]
    %v125 = vld [vmem:[%s1 + $0xac] sm:$0xf]
    %v126 = vld [vmem:[%s1 + $0xb0] sm:$0xf]
    %v127 = vld [vmem:[%s1 + $0xb4] sm:$0xf]
    %v128 = vld [vmem:[%s1 + $0xb8] sm:$0xf]
    %v129 = vld [vmem:[%s1 + $0xbc] sm:$0xf]
    %v130 = vld [vmem:[%s1 + $0xc0] sm:$0xf]
    %v131 = vld [vmem:[%s1 + $0xc4] sm:$0xf]
    %v132 = vld [vmem:[%s1 + $0xc8] sm:$0xf]
    %v133 = vld [vmem:[%s1 + $0xcc] sm:$0xf]
    %v134 = vld [vmem:[%s1 + $0xd0] sm:$0xf]
    %v135 = vld [vmem:[%s1 + $0xd4] sm:$0xf]
    %v136 = vld [vmem:[%s1 + $0xd8] sm:$0xf]
    %v137 = vld [vmem:[%s1 + $0xdc] sm:$0xf]
    %v138 = vld [vmem:[%s1 + $0xe0] sm:$0xf]
    %v139 = vld [vmem:[%s1 + $0xe4] sm:$0xf]
    %v140 = vld [vmem:[%s1 + $0xe8] sm:$0xf]
    %v141 = vld [vmem:[%s1 + $0xec] sm:$0xf]
    %v142 = vld [vmem:[%s1 + $0xf0] sm:$0xf]
    %v143 = vld [vmem:[%s1 + $0xf4] sm:$0xf]
    %v144 = vld [vmem:[%s1 + $0xf8] sm:$0xf]
    %v145 = vld [vmem:[%s1 + $0xfc] sm:$0xf]
    %v146 = vld [vmem:[%s1 + $0x100] sm:$0xf]
    %v147 = vld [vmem:[%s1 + $0x104] sm:$0xf]
    %v148 = vld [vmem:[%s1 + $0x108] sm:$0xf]
    %v149 = vld [vmem:[%s1 + $0x10c] sm:$0xf]
    %v150 = vld [vmem:[%s1 + $0x110] sm:$0xf]
    %v151 = vld [vmem:[%s1 + $0x114] sm:$0xf]
    %v152 = vld [vmem:[%s1 + $0x118] sm:$0xf]
    %v153 = vld [vmem:[%s1 + $0x11c] sm:$0xf]
    %v154 = vld [vmem:[%s1 + $0x120] sm:$0xf]
    %v155 = vld [vmem:[%s1 + $0x124] sm:$0xf]
    %v156 = vld [vmem:[%s1 + $0x128] sm:$0xf]
    %v157 = vld [vmem:[%s1 + $0x12c] sm:$0xf]
    %v158 = vld [vmem:[%s1 + $0x130] sm:$0xf]
    %v159 = vld [vmem:[%s1 + $0x134] sm:$0xf]
    %v160 = vld [vmem:[%s1 + $0x138] sm:$0xf]
    %v161 = vld [vmem:[%s1 + $0x13c] sm:$0xf]
    %v162 = vld [vmem:[%s1 + $0x140] sm:$0xf]
    %v163 = vld [vmem:[%s1 + $0x144] sm:$0xf]
    %v164 = vld [vmem:[%s1 + $0x148] sm:$0xf]
    %v165 = vld [vmem:[%s1 + $0x14c] sm:$0xf]
    %v166 = vld [vmem:[%s1 + $0x150] sm:$0xf]
    %v167 = vld [vmem:[%s1 + $0x154] sm:$0xf]
    %v168 = vld [vmem:[%s1 + $0x158] sm:$0xf]
    %v169 = vld [vmem:[%s1 + $0x15c] sm:$0xf]
    %v170 = vld [vmem:[%s1 + $0x160] sm:$0xf]
    %v171 = vld [vmem:[%s1 + $0x164] sm:$0xf]
    %v172 = vld [vmem:[%s1 + $0x168] sm:$0xf]
    %v173 = vld [vmem:[%s1 + $0x16c] sm:$0xf]
    %v174 = vld [vmem:[%s1 + $0x170] sm:$0xf]
    %v175 = vld [vmem:[%s1 + $0x174] sm:$0xf]
    %v176 = vld [vmem:[%s1 + $0x178] sm:$0xf]
    %v177 = vld [vmem:[%s1 + $0x17c] sm:$0xf]
    %v178 = vld [vmem:[%s1 + $0x180] sm:$0xf]
    %v179 = vld [vmem:[%s1 + $0x184] sm:$0xf]
    %v180 = vld [vmem:[%s1 + $0x188] sm:$0xf]
    %v181 = vld [vmem:[%s1 + $0x18c] sm:$0xf]
    %v182 = vld [vmem:[%s1 + $0x190] sm:$0xf]
    %v183 = vld [vmem:[%s1 + $0x194] sm:$0xf]
    %v184 = vld [vmem:[%s1 + $0x198] sm:$0xf]
    %v185 = vld [vmem:[%s1 + $0x19c] sm:$0xf]
    %v186 = vld [vmem:[%s1 + $0x1a0] sm:$0xf]
    %v187 = vld [vmem:[%s1 + $0x1a4] sm:$0xf]
    %v188 = vld [vmem:[%s1 + $0x1a8] sm:$0xf]
    %v189 = vld [vmem:[%s1 + $0x1ac] sm:$0xf]
    %v190 = vld [vmem:[%s1 + $0x1b0] sm:$0xf]
    %v191 = vld [vmem:[%s1 + $0x1b4] sm:$0xf]
    %v192 = vld [vmem:[%s1 + $0x1b8] sm:$0xf]
    %v193 = vld [vmem:[%s1 + $0x1bc] sm:$0xf]
    %v194 = vld [vmem:[%s1 + $0x1c0] sm:$0xf]
    %v195 = vld [vmem:[%s1 + $0x1c4] sm:$0xf]
    %v196 = vld [vmem:[%s1 + $0x1c8] sm:$0xf]
    %v197 = vld [vmem:[%s1 + $0x1cc] sm:$0xf]
    %v198 = vld [vmem:[%s1 + $0x1d0] sm:$0xf]
    %v199 = vld [vmem:[%s1 + $0x1d4] sm:$0xf]
    %v200 = vld [vmem:[%s1 + $0x1d8] sm:$0xf]
    %v201 = vld [vmem:[%s1 + $0x1dc] sm:$0xf]
    %v202 = vld [vmem:[%s1 + $0x1e0] sm:$0xf]
    %v203 = vld [vmem:[%s1 + $0x1e4] sm:$0xf]
    %v204 = vld [vmem:[%s1 + $0x1e8] sm:$0xf]
    %v205 = vld [vmem:[%s1 + $0x1ec] sm:$0xf]
    %v206 = vld [vmem:[%s1 + $0x1f0] sm:$0xf]
    %v207 = vld [vmem:[%s1 + $0x1f4] sm:$0xf]
    %v208 = vld [vmem:[%s1 + $0x1f8] sm:$0xf]
    %v209 = vld [vmem:[%s1 + $0x1fc] sm:$0xf]
    %v210 = vld [vmem:[%s2] sm:$0x1]
    %v212 = vlaneseq
    %v213 = vshrl.u32 %v212, 7
    %v214 = vsub.s32 0, %v213
    %v215 = vrot.slane %v210, %v214
    %v345 = vunpack.c.l.b16 %v82
    %v346 = vunpack.c.l.b16 %v83
    %v347 = vunpack.c.l.b16 %v84
    %v348 = vunpack.c.l.b16 %v85
    %v349 = vunpack.c.l.b16 %v86
    %v350 = vunpack.c.l.b16 %v87
    %v351 = vunpack.c.l.b16 %v88
    %v352 = vunpack.c.l.b16 %v89
    %v353 = vunpack.c.l.b16 %v90
    %v354 = vunpack.c.l.b16 %v91
    %v355 = vunpack.c.l.b16 %v92
    %v356 = vunpack.c.l.b16 %v93
    %v357 = vunpack.c.l.b16 %v94
    %v358 = vunpack.c.l.b16 %v95
    %v359 = vunpack.c.l.b16 %v96
    %v360 = vunpack.c.l.b16 %v97
    %v361 = vunpack.c.l.b16 %v98
    %v362 = vunpack.c.l.b16 %v99
    %v363 = vunpack.c.l.b16 %v100
    %v364 = vunpack.c.l.b16 %v101
    %v365 = vunpack.c.l.b16 %v102
    %v366 = vunpack.c.l.b16 %v103
    %v367 = vunpack.c.l.b16 %v104
    %v368 = vunpack.c.l.b16 %v105
    %v369 = vunpack.c.l.b16 %v106
    %v370 = vunpack.c.l.b16 %v107
    %v371 = vunpack.c.l.b16 %v108
    %v372 = vunpack.c.l.b16 %v109
    %v373 = vunpack.c.l.b16 %v110
    %v374 = vunpack.c.l.b16 %v111
    %v375 = vunpack.c.l.b16 %v112
    %v376 = vunpack.c.l.b16 %v113
    %v377 = vunpack.c.l.b16 %v114
    %v378 = vunpack.c.l.b16 %v115
    %v379 = vunpack.c.l.b16 %v116
    %v380 = vunpack.c.l.b16 %v117
    %v381 = vunpack.c.l.b16 %v118
    %v382 = vunpack.c.l.b16 %v119
    %v383 = vunpack.c.l.b16 %v120
    %v384 = vunpack.c.l.b16 %v121
    %v385 = vunpack.c.l.b16 %v122
    %v386 = vunpack.c.l.b16 %v123
    %v387 = vunpack.c.l.b16 %v124
    %v388 = vunpack.c.l.b16 %v125
    %v389 = vunpack.c.l.b16 %v126
    %v390 = vunpack.c.l.b16 %v127
    %v391 = vunpack.c.l.b16 %v128
    %v392 = vunpack.c.l.b16 %v129
    %v393 = vunpack.c.l.b16 %v130
    %v394 = vunpack.c.l.b16 %v131
    %v395 = vunpack.c.l.b16 %v132
    %v396 = vunpack.c.l.b16 %v133
    %v397 = vunpack.c.l.b16 %v134
    %v398 = vunpack.c.l.b16 %v135
    %v399 = vunpack.c.l.b16 %v136
    %v400 = vunpack.c.l.b16 %v137
    %v401 = vunpack.c.l.b16 %v138
    %v402 = vunpack.c.l.b16 %v139
    %v403 = vunpack.c.l.b16 %v140
    %v404 = vunpack.c.l.b16 %v141
    %v405 = vunpack.c.l.b16 %v142
    %v406 = vunpack.c.l.b16 %v143
    %v407 = vunpack.c.l.b16 %v144
    %v408 = vunpack.c.l.b16 %v145
    %v409 = vunpack.c.l.b16 %v146
    %v410 = vunpack.c.l.b16 %v147
    %v411 = vunpack.c.l.b16 %v148
    %v412 = vunpack.c.l.b16 %v149
    %v413 = vunpack.c.l.b16 %v150
    %v414 = vunpack.c.l.b16 %v151
    %v415 = vunpack.c.l.b16 %v152
    %v416 = vunpack.c.l.b16 %v153
    %v417 = vunpack.c.l.b16 %v154
    %v418 = vunpack.c.l.b16 %v155
    %v419 = vunpack.c.l.b16 %v156
    %v420 = vunpack.c.l.b16 %v157
    %v421 = vunpack.c.l.b16 %v158
    %v422 = vunpack.c.l.b16 %v159
    %v423 = vunpack.c.l.b16 %v160
    %v424 = vunpack.c.l.b16 %v161
    %v425 = vunpack.c.l.b16 %v162
    %v426 = vunpack.c.l.b16 %v163
    %v427 = vunpack.c.l.b16 %v164
    %v428 = vunpack.c.l.b16 %v165
    %v429 = vunpack.c.l.b16 %v166
    %v430 = vunpack.c.l.b16 %v167
    %v431 = vunpack.c.l.b16 %v168
    %v432 = vunpack.c.l.b16 %v169
    %v433 = vunpack.c.l.b16 %v170
    %v434 = vunpack.c.l.b16 %v171
    %v435 = vunpack.c.l.b16 %v172
    %v436 = vunpack.c.l.b16 %v173
    %v437 = vunpack.c.l.b16 %v174
    %v438 = vunpack.c.l.b16 %v175
    %v439 = vunpack.c.l.b16 %v176
    %v440 = vunpack.c.l.b16 %v177
    %v441 = vunpack.c.l.b16 %v178
    %v442 = vunpack.c.l.b16 %v179
    %v443 = vunpack.c.l.b16 %v180
    %v444 = vunpack.c.l.b16 %v181
    %v445 = vunpack.c.l.b16 %v182
    %v446 = vunpack.c.l.b16 %v183
    %v447 = vunpack.c.l.b16 %v184
    %v448 = vunpack.c.l.b16 %v185
    %v449 = vunpack.c.l.b16 %v186
    %v450 = vunpack.c.l.b16 %v187
    %v451 = vunpack.c.l.b16 %v188
    %v452 = vunpack.c.l.b16 %v189
    %v453 = vunpack.c.l.b16 %v190
    %v454 = vunpack.c.l.b16 %v191
    %v455 = vunpack.c.l.b16 %v192
    %v456 = vunpack.c.l.b16 %v193
    %v457 = vunpack.c.l.b16 %v194
    %v458 = vunpack.c.l.b16 %v195
    %v459 = vunpack.c.l.b16 %v196
    %v460 = vunpack.c.l.b16 %v197
    %v461 = vunpack.c.l.b16 %v198
    %v462 = vunpack.c.l.b16 %v199
    %v463 = vunpack.c.l.b16 %v200
    %v464 = vunpack.c.l.b16 %v201
    %v465 = vunpack.c.l.b16 %v202
    %v466 = vunpack.c.l.b16 %v203
    %v467 = vunpack.c.l.b16 %v204
    %v468 = vunpack.c.l.b16 %v205
    %v469 = vunpack.c.l.b16 %v206
    %v470 = vunpack.c.l.b16 %v207
    %v471 = vunpack.c.l.b16 %v208
    %v472 = vunpack.c.l.b16 %v209
    %v473 = vpack.c.b16 %v346, %v345
    %v474 = vpack.c.b16 %v348, %v347
    %v475 = vpack.c.b16 %v350, %v349
    %v476 = vpack.c.b16 %v352, %v351
    %v477 = vpack.c.b16 %v354, %v353
    %v478 = vpack.c.b16 %v356, %v355
    %v479 = vpack.c.b16 %v358, %v357
    %v480 = vpack.c.b16 %v360, %v359
    %v481 = vpack.c.b16 %v362, %v361
    %v482 = vpack.c.b16 %v364, %v363
    %v483 = vpack.c.b16 %v366, %v365
    %v484 = vpack.c.b16 %v368, %v367
    %v485 = vpack.c.b16 %v370, %v369
    %v486 = vpack.c.b16 %v372, %v371
    %v487 = vpack.c.b16 %v374, %v373
    %v488 = vpack.c.b16 %v376, %v375
    %v489 = vpack.c.b16 %v378, %v377
    %v490 = vpack.c.b16 %v380, %v379
    %v491 = vpack.c.b16 %v382, %v381
    %v492 = vpack.c.b16 %v384, %v383
    %v493 = vpack.c.b16 %v386, %v385
    %v494 = vpack.c.b16 %v388, %v387
    %v495 = vpack.c.b16 %v390, %v389
    %v496 = vpack.c.b16 %v392, %v391
    %v497 = vpack.c.b16 %v394, %v393
    %v498 = vpack.c.b16 %v396, %v395
    %v499 = vpack.c.b16 %v398, %v397
    %v500 = vpack.c.b16 %v400, %v399
    %v501 = vpack.c.b16 %v402, %v401
    %v502 = vpack.c.b16 %v404, %v403
    %v503 = vpack.c.b16 %v406, %v405
    %v504 = vpack.c.b16 %v408, %v407
    %v505 = vpack.c.b16 %v410, %v409
    %v506 = vpack.c.b16 %v412, %v411
    %v507 = vpack.c.b16 %v414, %v413
    %v508 = vpack.c.b16 %v416, %v415
    %v509 = vpack.c.b16 %v418, %v417
    %v510 = vpack.c.b16 %v420, %v419
    %v511 = vpack.c.b16 %v422, %v421
    %v512 = vpack.c.b16 %v424, %v423
    %v513 = vpack.c.b16 %v426, %v425
    %v514 = vpack.c.b16 %v428, %v427
    %v515 = vpack.c.b16 %v430, %v429
    %v516 = vpack.c.b16 %v432, %v431
    %v517 = vpack.c.b16 %v434, %v433
    %v518 = vpack.c.b16 %v436, %v435
    %v519 = vpack.c.b16 %v438, %v437
    %v520 = vpack.c.b16 %v440, %v439
    %v521 = vpack.c.b16 %v442, %v441
    %v522 = vpack.c.b16 %v444, %v443
    %v523 = vpack.c.b16 %v446, %v445
    %v524 = vpack.c.b16 %v448, %v447
    %v525 = vpack.c.b16 %v450, %v449
    %v526 = vpack.c.b16 %v452, %v451
    %v527 = vpack.c.b16 %v454, %v453
    %v528 = vpack.c.b16 %v456, %v455
    %v529 = vpack.c.b16 %v458, %v457
    %v530 = vpack.c.b16 %v460, %v459
    %v531 = vpack.c.b16 %v462, %v461
    %v532 = vpack.c.b16 %v464, %v463
    %v533 = vpack.c.b16 %v466, %v465
    %v534 = vpack.c.b16 %v468, %v467
    %v535 = vpack.c.b16 %v470, %v469
    %v536 = vpack.c.b16 %v472, %v471
    %601 = vmatprep.subr.bf16.mxu0 0
    %602 = vmatpush1.bf16.msra.mxu0 %v473
    %603 = vmatprep.subr.bf16.mxu0 0
    %604 = vmatpush1.bf16.msra.mxu0 %v474
    %605 = vmatprep.subr.bf16.mxu0 0
    %606 = vmatpush1.bf16.msra.mxu0 %v475
    %607 = vmatprep.subr.bf16.mxu0 0
    %608 = vmatpush1.bf16.msra.mxu0 %v476
    %609 = vmatprep.subr.bf16.mxu0 0
    %610 = vmatpush1.bf16.msra.mxu0 %v477
    %611 = vmatprep.subr.bf16.mxu0 0
    %612 = vmatpush1.bf16.msra.mxu0 %v478
    %613 = vmatprep.subr.bf16.mxu0 0
    %614 = vmatpush1.bf16.msra.mxu0 %v479
    %615 = vmatprep.subr.bf16.mxu0 0
    %616 = vmatpush1.bf16.msra.mxu0 %v480
    %617 = vmatprep.subr.bf16.mxu0 0
    %618 = vmatpush1.bf16.msra.mxu0 %v481
    %619 = vmatprep.subr.bf16.mxu0 0
    %620 = vmatpush1.bf16.msra.mxu0 %v482
    %621 = vmatprep.subr.bf16.mxu0 0
    %622 = vmatpush1.bf16.msra.mxu0 %v483
    %623 = vmatprep.subr.bf16.mxu0 0
    %624 = vmatpush1.bf16.msra.mxu0 %v484
    %625 = vmatprep.subr.bf16.mxu0 0
    %626 = vmatpush1.bf16.msra.mxu0 %v485
    %627 = vmatprep.subr.bf16.mxu0 0
    %628 = vmatpush1.bf16.msra.mxu0 %v486
    %629 = vmatprep.subr.bf16.mxu0 0
    %630 = vmatpush1.bf16.msra.mxu0 %v487
    %631 = vmatprep.subr.bf16.mxu0 0
    %632 = vmatpush1.bf16.msra.mxu0 %v488
    %633 = vmatprep.mubr.bf16.mxu0 %v75
    %634 = vmatmul.mubr.bf16.gmra.mrb[0].mxu0 %v74
    %v635 = vpop.f32.mrb[0].mxu0
    %v636 = vadd.f32 %v215, %v635
    %v637 = vpop.f32.mrb[0].mxu0
    %v638 = vpop.f32.mrb[0].mxu0
    %v639 = vpop.f32.mrb[0].mxu0
    %640 = vdwg.mxu0
    %641 = vmatprep.subr.bf16.mxu0 0
    %642 = vmatpush1.bf16.msra.mxu0 %v489
    %643 = vmatprep.subr.bf16.mxu0 0
    %644 = vmatpush1.bf16.msra.mxu0 %v490
    %645 = vmatprep.subr.bf16.mxu0 0
    %646 = vmatpush1.bf16.msra.mxu0 %v491
    %647 = vmatprep.subr.bf16.mxu0 0
    %648 = vmatpush1.bf16.msra.mxu0 %v492
    %649 = vmatprep.subr.bf16.mxu0 0
    %650 = vmatpush1.bf16.msra.mxu0 %v493
    %651 = vmatprep.subr.bf16.mxu0 0
    %652 = vmatpush1.bf16.msra.mxu0 %v494
    %653 = vmatprep.subr.bf16.mxu0 0
    %654 = vmatpush1.bf16.msra.mxu0 %v495
    %655 = vmatprep.subr.bf16.mxu0 0
    %656 = vmatpush1.bf16.msra.mxu0 %v496
    %657 = vmatprep.subr.bf16.mxu0 0
    %658 = vmatpush1.bf16.msra.mxu0 %v497
    %659 = vmatprep.subr.bf16.mxu0 0
    %660 = vmatpush1.bf16.msra.mxu0 %v498
    %661 = vmatprep.subr.bf16.mxu0 0
    %662 = vmatpush1.bf16.msra.mxu0 %v499
    %663 = vmatprep.subr.bf16.mxu0 0
    %664 = vmatpush1.bf16.msra.mxu0 %v500
    %665 = vmatprep.subr.bf16.mxu0 0
    %666 = vmatpush1.bf16.msra.mxu0 %v501
    %667 = vmatprep.subr.bf16.mxu0 0
    %668 = vmatpush1.bf16.msra.mxu0 %v502
    %669 = vmatprep.subr.bf16.mxu0 0
    %670 = vmatpush1.bf16.msra.mxu0 %v503
    %671 = vmatprep.subr.bf16.mxu0 0
    %672 = vmatpush1.bf16.msra.mxu0 %v504
    %673 = vmatprep.mubr.bf16.mxu0 %v77
    %674 = vmatmul.mubr.bf16.gmra.mrb[0].mxu0 %v76
    %v675 = vpop.f32.mrb[0].mxu0
    %v676 = vadd.f32 %v636, %v675
    %v677 = vpop.f32.mrb[0].mxu0
    %v678 = vpop.f32.mrb[0].mxu0
    %v679 = vpop.f32.mrb[0].mxu0
    %680 = vdwg.mxu0
    %681 = vmatprep.subr.bf16.mxu0 0
    %682 = vmatpush1.bf16.msra.mxu0 %v505
    %683 = vmatprep.subr.bf16.mxu0 0
    %684 = vmatpush1.bf16.msra.mxu0 %v506
    %685 = vmatprep.subr.bf16.mxu0 0
    %686 = vmatpush1.bf16.msra.mxu0 %v507
    %687 = vmatprep.subr.bf16.mxu0 0
    %688 = vmatpush1.bf16.msra.mxu0 %v508
    %689 = vmatprep.subr.bf16.mxu0 0
    %690 = vmatpush1.bf16.msra.mxu0 %v509
    %691 = vmatprep.subr.bf16.mxu0 0
    %692 = vmatpush1.bf16.msra.mxu0 %v510
    %693 = vmatprep.subr.bf16.mxu0 0
    %694 = vmatpush1.bf16.msra.mxu0 %v511
    %695 = vmatprep.subr.bf16.mxu0 0
    %696 = vmatpush1.bf16.msra.mxu0 %v512
    %697 = vmatprep.subr.bf16.mxu0 0
    %698 = vmatpush1.bf16.msra.mxu0 %v513
    %699 = vmatprep.subr.bf16.mxu0 0
    %700 = vmatpush1.bf16.msra.mxu0 %v514
    %701 = vmatprep.subr.bf16.mxu0 0
    %702 = vmatpush1.bf16.msra.mxu0 %v515
    %703 = vmatprep.subr.bf16.mxu0 0
    %704 = vmatpush1.bf16.msra.mxu0 %v516
    %705 = vmatprep.subr.bf16.mxu0 0
    %706 = vmatpush1.bf16.msra.mxu0 %v517
    %707 = vmatprep.subr.bf16.mxu0 0
    %708 = vmatpush1.bf16.msra.mxu0 %v518
    %709 = vmatprep.subr.bf16.mxu0 0
    %710 = vmatpush1.bf16.msra.mxu0 %v519
    %711 = vmatprep.subr.bf16.mxu0 0
    %712 = vmatpush1.bf16.msra.mxu0 %v520
    %713 = vmatprep.mubr.bf16.mxu0 %v79
    %714 = vmatmul.mubr.bf16.gmra.mrb[0].mxu0 %v78
    %v715 = vpop.f32.mrb[0].mxu0
    %v716 = vadd.f32 %v676, %v715
    %v717 = vpop.f32.mrb[0].mxu0
    %v718 = vpop.f32.mrb[0].mxu0
    %v719 = vpop.f32.mrb[0].mxu0
    %720 = vdwg.mxu0
    %721 = vmatprep.subr.bf16.mxu0 0
    %722 = vmatpush1.bf16.msra.mxu0 %v521
    %723 = vmatprep.subr.bf16.mxu0 0
    %724 = vmatpush1.bf16.msra.mxu0 %v522
    %725 = vmatprep.subr.bf16.mxu0 0
    %726 = vmatpush1.bf16.msra.mxu0 %v523
    %727 = vmatprep.subr.bf16.mxu0 0
    %728 = vmatpush1.bf16.msra.mxu0 %v524
    %729 = vmatprep.subr.bf16.mxu0 0
    %730 = vmatpush1.bf16.msra.mxu0 %v525
    %731 = vmatprep.subr.bf16.mxu0 0
    %732 = vmatpush1.bf16.msra.mxu0 %v526
    %733 = vmatprep.subr.bf16.mxu0 0
    %734 = vmatpush1.bf16.msra.mxu0 %v527
    %735 = vmatprep.subr.bf16.mxu0 0
    %736 = vmatpush1.bf16.msra.mxu0 %v528
    %737 = vmatprep.subr.bf16.mxu0 0
    %738 = vmatpush1.bf16.msra.mxu0 %v529
    %739 = vmatprep.subr.bf16.mxu0 0
    %740 = vmatpush1.bf16.msra.mxu0 %v530
    %741 = vmatprep.subr.bf16.mxu0 0
    %742 = vmatpush1.bf16.msra.mxu0 %v531
    %743 = vmatprep.subr.bf16.mxu0 0
    %744 = vmatpush1.bf16.msra.mxu0 %v532
    %745 = vmatprep.subr.bf16.mxu0 0
    %746 = vmatpush1.bf16.msra.mxu0 %v533
    %747 = vmatprep.subr.bf16.mxu0 0
    %748 = vmatpush1.bf16.msra.mxu0 %v534
    %749 = vmatprep.subr.bf16.mxu0 0
    %750 = vmatpush1.bf16.msra.mxu0 %v535
    %751 = vmatprep.subr.bf16.mxu0 0
    %752 = vmatpush1.bf16.msra.mxu0 %v536
    %753 = vmatprep.mubr.bf16.mxu0 %v81
    %754 = vmatmul.mubr.bf16.gmra.mrb[0].mxu0 %v80
    %v755 = vpop.f32.mrb[0].mxu0
    %v756 = vadd.f32 %v716, %v755
    %v757 = vpop.f32.mrb[0].mxu0
    %v758 = vpop.f32.mrb[0].mxu0
    %v759 = vpop.f32.mrb[0].mxu0
    %760 = vdwg.mxu0
    %v761 = vmax.f32 %v756, 0.0
    %v762 = vpack.c.bf16 %v761, %v761
    %v763 = vld [vmem:[%s3] sm:$0xf]
    %v764 = vld [vmem:[%s3 + $0x4] sm:$0xf]
    %v765 = vld [vmem:[%s3 + $0x8] sm:$0xf]
    %v766 = vld [vmem:[%s3 + $0xc] sm:$0xf]
    %v767 = vld [vmem:[%s4] sm:$0x1]
    %v769 = vlaneseq
    %v770 = vshrl.u32 %v769, 7
    %v771 = vsub.s32 0, %v770
    %v772 = vrot.slane %v767, %v771
    %v778 = vunpack.c.l.b16 %v763
    %v779 = vunpack.c.l.b16 %v764
    %v780 = vunpack.c.l.b16 %v765
    %v781 = vunpack.c.l.b16 %v766
    %v782 = vpack.c.b16 %v779, %v778
    %v783 = vpack.c.b16 %v781, %v780
    %vm786 = vcmask 261120
    %v788 = vsel %vm786, %v762, 0
    %790 = vmatprep.subr.bf16.mxu0 0
    %791 = vmatpush1.bf16.msra.mxu0 %v782
    %792 = vmatprep.subr.bf16.mxu0 0
    %793 = vmatpush1.bf16.msra.mxu0 %v783
    %794 = vmatprep.subr.bf16.mxu0 0
    %795 = vmatpush1.bf16.msra.mxu0 0
    %796 = vmatprep.subr.bf16.mxu0 0
    %797 = vmatpush1.bf16.msra.mxu0 0
    %798 = vmatprep.subr.bf16.mxu0 0
    %799 = vmatpush1.bf16.msra.mxu0 0
    %800 = vmatprep.subr.bf16.mxu0 0
    %801 = vmatpush1.bf16.msra.mxu0 0
    %802 = vmatprep.subr.bf16.mxu0 0
    %803 = vmatpush1.bf16.msra.mxu0 0
    %804 = vmatprep.subr.bf16.mxu0 0
    %805 = vmatpush1.bf16.msra.mxu0 0
    %806 = vmatprep.subr.bf16.mxu0 0
    %807 = vmatpush1.bf16.msra.mxu0 0
    %808 = vmatprep.subr.bf16.mxu0 0
    %809 = vmatpush1.bf16.msra.mxu0 0
    %810 = vmatprep.subr.bf16.mxu0 0
    %811 = vmatpush1.bf16.msra.mxu0 0
    %812 = vmatprep.subr.bf16.mxu0 0
    %813 = vmatpush1.bf16.msra.mxu0 0
    %814 = vmatprep.subr.bf16.mxu0 0
    %815 = vmatpush1.bf16.msra.mxu0 0
    %816 = vmatprep.subr.bf16.mxu0 0
    %817 = vmatpush1.bf16.msra.mxu0 0
    %818 = vmatprep.subr.bf16.mxu0 0
    %819 = vmatpush1.bf16.msra.mxu0 0
    %820 = vmatprep.subr.bf16.mxu0 0
    %821 = vmatpush1.bf16.msra.mxu0 0
    %822 = vmatprep.mubr.bf16.mxu0 0
    %823 = vmatmul.mubr.bf16.gmra.mrb[0].mxu0 %v788
    %v824 = vpop.f32.mrb[0].mxu0
    %v825 = vadd.f32 %v772, %v824
    %v826 = vpop.f32.mrb[0].mxu0
    %v827 = vpop.f32.mrb[0].mxu0
    %v828 = vpop.f32.mrb[0].mxu0
    %829 = vdwg.mxu0
    %v830 = vmax.f32 %v825, 0.0
    %v831 = vpack.c.bf16 %v830, %v830
    %v832 = vld [vmem:[%s5] sm:$0xf]
    %v833 = vld [vmem:[%s5 + $0x4] sm:$0xf]
    %v834 = vld [vmem:[%s5 + $0x8] sm:$0xf]
    %v835 = vld [vmem:[%s5 + $0xc] sm:$0xf]
    %v836 = vld [vmem:[%s6] sm:$0x1]
    %v838 = vlaneseq
    %v839 = vshrl.u32 %v838, 7
    %v840 = vsub.s32 0, %v839
    %v841 = vrot.slane %v836, %v840
    %v847 = vunpack.c.l.b16 %v832
    %v848 = vunpack.c.l.b16 %v833
    %v849 = vunpack.c.l.b16 %v834
    %v850 = vunpack.c.l.b16 %v835
    %v851 = vpack.c.b16 %v848, %v847
    %v852 = vpack.c.b16 %v850, %v849
    %v856 = vsel %vm786, %v831, 0
    %858 = vmatprep.subr.bf16.mxu0 0
    %859 = vmatpush1.bf16.msra.mxu0 %v851
    %860 = vmatprep.subr.bf16.mxu0 0
    %861 = vmatpush1.bf16.msra.mxu0 %v852
    %862 = vmatprep.subr.bf16.mxu0 0
    %863 = vmatpush1.bf16.msra.mxu0 0
    %864 = vmatprep.subr.bf16.mxu0 0
    %865 = vmatpush1.bf16.msra.mxu0 0
    %866 = vmatprep.subr.bf16.mxu0 0
    %867 = vmatpush1.bf16.msra.mxu0 0
    %868 = vmatprep.subr.bf16.mxu0 0
    %869 = vmatpush1.bf16.msra.mxu0 0
    %870 = vmatprep.subr.bf16.mxu0 0
    %871 = vmatpush1.bf16.msra.mxu0 0
    %872 = vmatprep.subr.bf16.mxu0 0
    %873 = vmatpush1.bf16.msra.mxu0 0
    %874 = vmatprep.subr.bf16.mxu0 0
    %875 = vmatpush1.bf16.msra.mxu0 0
    %876 = vmatprep.subr.bf16.mxu0 0
    %877 = vmatpush1.bf16.msra.mxu0 0
    %878 = vmatprep.subr.bf16.mxu0 0
    %879 = vmatpush1.bf16.msra.mxu0 0
    %880 = vmatprep.subr.bf16.mxu0 0
    %881 = vmatpush1.bf16.msra.mxu0 0
    %882 = vmatprep.subr.bf16.mxu0 0
    %883 = vmatpush1.bf16.msra.mxu0 0
    %884 = vmatprep.subr.bf16.mxu0 0
    %885 = vmatpush1.bf16.msra.mxu0 0
    %886 = vmatprep.subr.bf16.mxu0 0
    %887 = vmatpush1.bf16.msra.mxu0 0
    %888 = vmatprep.subr.bf16.mxu0 0
    %889 = vmatpush1.bf16.msra.mxu0 0
    %890 = vmatprep.mubr.bf16.mxu0 0
    %891 = vmatmul.mubr.bf16.gmra.mrb[0].mxu0 %v856
    %v892 = vpop.f32.mrb[0].mxu0
    %v893 = vadd.f32 %v841, %v892
    %v894 = vpop.f32.mrb[0].mxu0
    %v895 = vpop.f32.mrb[0].mxu0
    %v896 = vpop.f32.mrb[0].mxu0
    %897 = vdwg.mxu0
    %898 = vst [vmem:[#allocation2] sm:$0x3] %v893
    // Predicated region
    $region30: #{tpu_custom_call.1} parent=1 // pred_check
      _
    $region31: #{tpu_custom_call.1} parent=1 // pred_check_branch
      %900 = sbr.rel (0) target = $region33
    $region32: #{tpu_custom_call.1} parent=1 // pred_region
      %s902 = ssub.s32 32, 32
      %903 = vsyncadd [#allocation3], %s902
      %s905 = sshll.u32 [#allocation2], 4
      %s906 = int_to_ptr.vmem [resolvable:$true] %s905
      %908 = dma.vmem_to_hbm [thread:$0]  %s906, 32, %s7, [#allocation3]
    $region33: #{tpu_custom_call.1} parent=1 // pred_fallthru
      _
    // Predicated region
    $region34: #{tpu_custom_call.1} parent=1 // pred_check
      _
    $region35: #{tpu_custom_call.1} parent=1 // pred_check_branch
      %910 = sbr.rel (0) target = $region37
    $region36: #{tpu_custom_call.1} parent=1 // pred_region
      %911 = dma.done [#allocation3], 32
    $region37: #{tpu_custom_call.1} parent=1 // pred_fallthru
      _
    %912 = vsyncpa [#allocation3], 1

</llo_original>
